<compile_context>
chip_gen: v7x
topology: tpu7x:2x2x1
jax: 0.10.0
libtpu: 0.0.40
codegen_flags: <defaults>
</compile_context>

<pallas_src>
import jax
import jax.numpy as jnp
from jax.experimental import pallas as pl
from jax.experimental.pallas import tpu as pltpu


def critic_kernel(x_ref, w12_ref, b12_ref, w3_ref, b3_ref, o_ref):
    # Fused fc_state: Linear(in,512) o Linear(512,256) == one matmul.
    # Read the f32 state tile and pack to bf16 in-kernel (VPU, effectively free);
    # accumulate in f32 on the MXU.
    x = x_ref[...].astype(jnp.bfloat16)
    st = jnp.dot(x, w12_ref[...], preferred_element_type=jnp.float32) + b12_ref[...]
    # fc[0]: ReLU on the f32 accumulator.
    h = jnp.maximum(st, 0.0)
    # fc[1]: Linear(256, 1) as a VPU row-broadcast multiply + lane reduction
    # (avoids an N=1 MXU matmul with a pathological 1-lane result layout).
    out = jnp.sum(h * w3_ref[...], axis=-1, keepdims=True) + b3_ref[...]
    o_ref[...] = out.astype(o_ref.dtype)


def critic_forward(state, fused_params, *, tile_b=None):
    """state: (B, input_size) f32.  fused_params from init_critic_params.
    Returns (B, 1) f32."""
    w12_bf, b12, w3_row, b3 = fused_params
    B, in_dim = state.shape

    # Batch tile heuristic:
    #  - B <= 256: one grid step (no per-step overhead).
    #  - B  > 256: at least two tiles so the "parallel" batch axis can shard
    #    across v7x's two TensorCores; cap at 512 rows so very large batches
    #    on single-TC v5e/v6e keep the step count (and overhead) low.
    if tile_b is None:
        if B <= 256:
            tile_b = B
        else:
            half = -(-B // 2)
            tile_b = min(512, ((half + 127) // 128) * 128)
    n_tiles = -(-B // tile_b)

    # No padding of `state`: rows never mix inside the kernel, so Pallas'
    # edge-block handling of a ragged last tile is safe (garbage rows are
    # computed but their output writes fall outside (B, 1) and are dropped).
    out = pl.pallas_call(
        critic_kernel,
        out_shape=jax.ShapeDtypeStruct((B, 1), jnp.float32),
        grid_spec=pltpu.PrefetchScalarGridSpec(
            num_scalar_prefetch=0,
            grid=(n_tiles,),
            in_specs=[
                # batch tile of the f32 state (cast to bf16 inside the kernel)
                pl.BlockSpec((tile_b, in_dim), lambda i: (i, 0)),
                # fused weights / biases: full arrays, constant index maps
                # (Pallas does not re-fetch blocks whose index doesn't change;
                #  total resident weight set is only ~20 KB for in_dim=32)
                pl.BlockSpec(w12_bf.shape, lambda i: (0, 0)),
                pl.BlockSpec(b12.shape, lambda i: (0, 0)),
                pl.BlockSpec(w3_row.shape, lambda i: (0, 0)),
                pl.BlockSpec(b3.shape, lambda i: (0, 0)),
            ],
            out_specs=pl.BlockSpec((tile_b, 1), lambda i: (i, 0)),
        ),
        compiler_params=pltpu.CompilerParams(
            dimension_semantics=("parallel",),
            vmem_limit_bytes=32 * 1024 * 1024,
        ),
    )(state, w12_bf, b12, w3_row, b3)

    return out


def init_critic_params(key, input_size):
    """PyTorch nn.Linear-style init (U[-1/sqrt(fan_in), +]).

    Returns (fused_params, raw_params):
      fused_params = (w12_bf16, b12_f32, w3_row_f32, b3_f32)  -- kernel inputs
      raw_params   = (w1, b1, w2, b2, w3, b3)                 -- f32 reference
    The W1 @ W2 fold is done ONCE here in f32, then cast to bf16 once, so the
    per-forward wrapper performs no casting / folding work.
    """
    def linear(k, fan_in, fan_out):
        kw, kb = jax.random.split(k)
        bound = fan_in ** -0.5
        w = jax.random.uniform(kw, (fan_in, fan_out), jnp.float32, -bound, bound)
        b = jax.random.uniform(kb, (fan_out,), jnp.float32, -bound, bound)
        return w, b

    k1, k2, k3 = jax.random.split(key, 3)
    w1, b1 = linear(k1, input_size, 512)   # fc_state[0]
    w2, b2 = linear(k2, 512, 256)          # fc_state[1]
    w3, b3 = linear(k3, 256, 1)            # fc[1]

    # Fold: (x @ W1 + b1) @ W2 + b2 == x @ (W1 @ W2) + (b1 @ W2 + b2)
    w12 = jnp.dot(w1, w2, preferred_element_type=jnp.float32)              # (in, 256)
    b12 = jnp.dot(b1[None, :], w2, preferred_element_type=jnp.float32) + b2[None, :]
    w12_bf = w12.astype(jnp.bfloat16)
    w3_row = w3.T                      # (1, 256) for the VPU reduction head
    b3_11 = b3.reshape(1, 1)

    fused = (w12_bf, b12, w3_row, b3_11)
    raw = (w1, b1, w2, b2, w3, b3)
    return fused, raw


def critic_reference_fused(state, fused_params):
    """Reference with the same fused / bf16-operand numerics as the kernel."""
    w12_bf, b12, w3_row, b3 = fused_params
    x = state.astype(jnp.bfloat16)
    st = jnp.dot(x, w12_bf, preferred_element_type=jnp.float32) + b12
    h = jnp.maximum(st, 0.0)
    return jnp.sum(h * w3_row, axis=-1, keepdims=True) + b3


def critic_reference_f32(state, raw_params):
    """Pure f32 reference matching the original PyTorch module."""
    w1, b1, w2, b2, w3, b3 = raw_params
    st = jnp.dot(state, w1) + b1
    st = jnp.dot(st, w2) + b2
    return jnp.dot(jnp.maximum(st, 0.0), w3) + b3


if __name__ == "__main__":
    key = jax.random.PRNGKey(0)
    k_params, k_state = jax.random.split(key)

    batch = 16
    input_size = 32   # state dimension
    # output_size (actions) only feeds fc_actions, which is unused in forward.

    fused_params, raw_params = init_critic_params(k_params, input_size)
    state = jax.random.normal(k_state, (batch, input_size), jnp.float32)

    out = critic_forward(state, fused_params)
    out = jax.block_until_ready(out)

    assert out.shape == (batch, 1)
    # Tight check against the matching-numerics (fused, bf16) reference.
    ref_fused = critic_reference_fused(state, fused_params)
    assert jnp.allclose(out, ref_fused, atol=1e-3, rtol=1e-3), "mismatch vs fused ref"
    # Loose check against the original f32 (unfused) model.
    ref_f32 = critic_reference_f32(state, raw_params)
    assert jnp.allclose(out, ref_f32, atol=3e-2, rtol=3e-2), "mismatch vs f32 ref"

    print("KERNEL_OK")
</pallas_src>

<mosaic_0001>
module attributes {stable_mosaic.version = 11 : i64} {
  func.func @critic_kernel(%arg0: i32, %arg1: memref<16x32xf32, #tpu.memory_space<vmem>>, %arg2: memref<32x256xbf16, #tpu.memory_space<vmem>>, %arg3: memref<1x256xf32, #tpu.memory_space<vmem>>, %arg4: memref<1x256xf32, #tpu.memory_space<vmem>>, %arg5: memref<1x1xf32, #tpu.memory_space<vmem>>, %arg6: memref<16x1xf32, #tpu.memory_space<vmem>>) attributes {dimension_semantics = [#tpu.dimension_semantics<parallel>], iteration_bounds = array<i64: 1>, scalar_prefetch = 0 : i64, scratch_operands = 0 : i64, tpu.core_type = #tpu.core_type<tc>, window_params = [{transform_indices = @transform_0, window_bounds = array<i64: 16, 32>}, {pipeline_mode = #tpu.pipeline_mode<synchronous>, transform_indices = @transform_1, window_bounds = array<i64: 32, 256>}, {pipeline_mode = #tpu.pipeline_mode<synchronous>, transform_indices = @transform_2, window_bounds = array<i64: 1, 256>}, {pipeline_mode = #tpu.pipeline_mode<synchronous>, transform_indices = @transform_3, window_bounds = array<i64: 1, 256>}, {pipeline_mode = #tpu.pipeline_mode<synchronous>, transform_indices = @transform_4, window_bounds = array<i64: 1, 1>}, {transform_indices = @transform_5, window_bounds = array<i64: 16, 1>}]} {
    %c0 = arith.constant 0 : index
    %c0_0 = arith.constant 0 : index
    %0 = vector.load %arg1[%c0, %c0_0] : memref<16x32xf32, #tpu.memory_space<vmem>>, vector<16x32xf32>
    %1 = arith.truncf %0 : vector<16x32xf32> to vector<16x32xbf16>
    %c0_1 = arith.constant 0 : index
    %c0_2 = arith.constant 0 : index
    %2 = vector.load %arg2[%c0_1, %c0_2] : memref<32x256xbf16, #tpu.memory_space<vmem>>, vector<32x256xbf16>
    %cst = arith.constant dense<0.000000e+00> : vector<16x256xf32>
    %3 = tpu.matmul %1, %2, %cst {dimension_numbers = #tpu.dot_dimension_numbers<[1], [0], [0], [1], [0, 0, 1, 1], [], []>} : vector<16x32xbf16>, vector<32x256xbf16>, vector<16x256xf32> -> vector<16x256xf32>
    %c0_3 = arith.constant 0 : index
    %c0_4 = arith.constant 0 : index
    %4 = vector.load %arg3[%c0_3, %c0_4] : memref<1x256xf32, #tpu.memory_space<vmem>>, vector<1x256xf32>
    %5 = vector.broadcast %4 : vector<1x256xf32> to vector<16x256xf32>
    %6 = arith.addf %3, %5 : vector<16x256xf32>
    %cst_5 = arith.constant 0.000000e+00 : f32
    %7 = vector.broadcast %cst_5 : f32 to vector<16x256xf32>
    %8 = arith.maximumf %6, %7 : vector<16x256xf32>
    %c0_6 = arith.constant 0 : index
    %c0_7 = arith.constant 0 : index
    %9 = vector.load %arg4[%c0_6, %c0_7] : memref<1x256xf32, #tpu.memory_space<vmem>>, vector<1x256xf32>
    %10 = vector.broadcast %9 : vector<1x256xf32> to vector<16x256xf32>
    %11 = arith.mulf %8, %10 : vector<16x256xf32>
    %cst_8 = arith.constant dense<0.000000e+00> : vector<16xf32>
    %12 = vector.multi_reduction <add>, %11, %cst_8 [1] : vector<16x256xf32> to vector<16xf32>
    %13 = vector.shape_cast %12 : vector<16xf32> to vector<16x1xf32>
    %c0_9 = arith.constant 0 : index
    %c0_10 = arith.constant 0 : index
    %14 = vector.load %arg5[%c0_9, %c0_10] : memref<1x1xf32, #tpu.memory_space<vmem>>, vector<1x1xf32>
    %15 = vector.broadcast %14 : vector<1x1xf32> to vector<16x1xf32>
    %16 = arith.addf %13, %15 : vector<16x1xf32>
    %c0_11 = arith.constant 0 : index
    %c0_12 = arith.constant 0 : index
    %17 = vector.load %arg6[%c0_11, %c0_12] : memref<16x1xf32, #tpu.memory_space<vmem>>, vector<16x1xf32>
    tpu.vector_store %arg6[%c0_11, %c0_12], %16 {strides = array<i32>} : memref<16x1xf32, #tpu.memory_space<vmem>>, vector<16x1xf32>,
    return
  }
  func.func @transform_0(%arg0: i32) -> (i32, i32) {
    %c0_i32 = arith.constant 0 : i32
    %c0_i32_0 = arith.constant 0 : i32
    return %arg0, %c0_i32 : i32, i32
  }
  func.func @transform_1(%arg0: i32) -> (i32, i32) {
    %c0_i32 = arith.constant 0 : i32
    %c0_i32_0 = arith.constant 0 : i32
    %c0_i32_1 = arith.constant 0 : i32
    return %c0_i32, %c0_i32_0 : i32, i32
  }
  func.func @transform_2(%arg0: i32) -> (i32, i32) {
    %c0_i32 = arith.constant 0 : i32
    %c0_i32_0 = arith.constant 0 : i32
    %c0_i32_1 = arith.constant 0 : i32
    return %c0_i32, %c0_i32_0 : i32, i32
  }
  func.func @transform_3(%arg0: i32) -> (i32, i32) {
    %c0_i32 = arith.constant 0 : i32
    %c0_i32_0 = arith.constant 0 : i32
    %c0_i32_1 = arith.constant 0 : i32
    return %c0_i32, %c0_i32_0 : i32, i32
  }
  func.func @transform_4(%arg0: i32) -> (i32, i32) {
    %c0_i32 = arith.constant 0 : i32
    %c0_i32_0 = arith.constant 0 : i32
    %c0_i32_1 = arith.constant 0 : i32
    return %c0_i32, %c0_i32_0 : i32, i32
  }
  func.func @transform_5(%arg0: i32) -> (i32, i32) {
    %c0_i32 = arith.constant 0 : i32
    %c0_i32_0 = arith.constant 0 : i32
    return %arg0, %c0_i32 : i32, i32
  }
}

</mosaic_0001>

<llo_original>
// kernel: tpu_custom_call.1
$region0: #{tpu_custom_call.1}
  #allocation0 [shape = 'u32[]', space=smem, size = 0x4, offset = 0x4, fixed_abs, tag = 'smem constant byte address 0x4 - core index']
  #allocation1 [shape = 'u32[144,128]{1,0:T(1,128)}', space=vmem, size = 0x12000, scoped, tag = 'internal scratch']
  #allocation2 [shape = 'f32[1,1]{1,0:T(1,128)S(1)}', space=vmem, size = 0x200, scoped, tag = 'scoped memory for tpu_custom_call.1']
  %s0 = inlined_call_operand.hbm [shape: f32[16,32], index: 0, kind: input, shape index: {}]
  %s1 = inlined_call_operand.hbm [shape: bf16[32,256], index: 1, kind: input, shape index: {}]
  %s2 = inlined_call_operand.vmem [shape: f32[1,256], index: 2, kind: input, shape index: {}]
  %s3 = inlined_call_operand.vmem [shape: f32[1,256], index: 3, kind: input, shape index: {}]
  %s4 = inlined_call_operand.<no memory space> [shape: f32[1,1], index: 4, kind: input, shape index: {}]
  %s5 = inlined_call_operand.vmem [shape: f32[16,1], index: 5, kind: output, shape index: {}]
  %s6 = sld [smem:[#allocation0]]
  $region38: #{tpu_custom_call.1} parent=0
    _
  %s8 = ssub.s32 1, %s6
  %s9 = scalar_select 0, %s8, %s6
  %v10 = vstv %s4
  %11 = vst [vmem:[#allocation2] sm:$0x1] %v10
  $region1: #{tpu_custom_call.1} parent=0
    #allocation3 [shape = 'u8[8192]{0}', space=vmem, size = 0x2000, scoped, tag = 'input window, operand 0, single buffered']
    #allocation4 [shape = 's32[1]{0}', space=sflag, size = 0x4, scoped, tag = 'scoped memory for tpu_custom_call.1']
    #allocation5 [shape = 'u8[16384]{0}', space=vmem, size = 0x4000, scoped, tag = 'input window, operand 1, single buffered']
    #allocation6 [shape = 's32[1]{0}', space=sflag, size = 0x4, scoped, tag = 'scoped memory for tpu_custom_call.1']
    %12 = vsyncpa [#allocation4], 0
    %13 = vsyncpa [#allocation6], 0
    // Predicated region
    $region2: #{tpu_custom_call.1} parent=1 // pred_check
      _
    $region3: #{tpu_custom_call.1} parent=1 // pred_check_branch
      %15 = sbr.rel (0) target = $region5
    $region4: #{tpu_custom_call.1} parent=1 // pred_region
      %s17 = ssub.s32 256, 256
      %18 = vsyncadd [#allocation4], %s17
      %s19 = sshll.u32 [#allocation3], 4
      %s20 = int_to_ptr.vmem [resolvable:$true] %s19
      %25 = dma.hbm_to_vmem [thread:$0]  %s0, 256, %s20, [#allocation4], 128, 128, 8
    $region5: #{tpu_custom_call.1} parent=1 // pred_fallthru
      _
    // Predicated region
    $region6: #{tpu_custom_call.1} parent=1 // pred_check
      _
    $region7: #{tpu_custom_call.1} parent=1 // pred_check_branch
      %27 = sbr.rel (0) target = $region9
    $region8: #{tpu_custom_call.1} parent=1 // pred_region
      %s29 = ssub.s32 512, 512
      %30 = vsyncadd [#allocation6], %s29
      %s31 = sshll.u32 [#allocation5], 4
      %s32 = int_to_ptr.vmem [resolvable:$true] %s31
      %37 = dma.hbm_to_vmem [thread:$0]  %s1, 512, %s32, [#allocation6], 128, 128, 8
    $region9: #{tpu_custom_call.1} parent=1 // pred_fallthru
      _
    // Predicated region
    $region10: #{tpu_custom_call.1} parent=1 // pred_check
      _
    $region11: #{tpu_custom_call.1} parent=1 // pred_check_branch
      %39 = sbr.rel (0) target = $region13
    $region12: #{tpu_custom_call.1} parent=1 // pred_region
      _
    $region13: #{tpu_custom_call.1} parent=1 // pred_fallthru
      _
    // Predicated region
    $region14: #{tpu_custom_call.1} parent=1 // pred_check
      _
    $region15: #{tpu_custom_call.1} parent=1 // pred_check_branch
      %41 = sbr.rel (0) target = $region17
    $region16: #{tpu_custom_call.1} parent=1 // pred_region
      _
    $region17: #{tpu_custom_call.1} parent=1 // pred_fallthru
      _
    // Predicated region
    $region18: #{tpu_custom_call.1} parent=1 // pred_check
      _
    $region19: #{tpu_custom_call.1} parent=1 // pred_check_branch
      %43 = sbr.rel (0) target = $region21
    $region20: #{tpu_custom_call.1} parent=1 // pred_region
      _
    $region21: #{tpu_custom_call.1} parent=1 // pred_fallthru
      _
    // Predicated region
    $region22: #{tpu_custom_call.1} parent=1 // pred_check
      _
    $region23: #{tpu_custom_call.1} parent=1 // pred_check_branch
      %45 = sbr.rel (0) target = $region25
    $region24: #{tpu_custom_call.1} parent=1 // pred_region
      %46 = dma.done [#allocation4], 256
    $region25: #{tpu_custom_call.1} parent=1 // pred_fallthru
      _
    // Predicated region
    $region26: #{tpu_custom_call.1} parent=1 // pred_check
      _
    $region27: #{tpu_custom_call.1} parent=1 // pred_check_branch
      %48 = sbr.rel (0) target = $region29
    $region28: #{tpu_custom_call.1} parent=1 // pred_region
      %49 = dma.done [#allocation6], 512
    $region29: #{tpu_custom_call.1} parent=1 // pred_fallthru
      _
    %v51 = vld [vmem:[#allocation3] sm:$0xff]
    %v52 = vld [vmem:[#allocation3 + $0x8] sm:$0xff]
    %v53 = vpack.c.bf16 %v52, %v51
    %v54 = vld [vmem:[#allocation5] sm:$0xff]
    %v55 = vld [vmem:[#allocation5 + $0x8] sm:$0xff]
    %v56 = vld [vmem:[#allocation5 + $0x10] sm:$0xff]
    %v57 = vld [vmem:[#allocation5 + $0x18] sm:$0xff]
    %v58 = vld [vmem:[%s2] sm:$0x3]
    %v60 = vlaneseq
    %v61 = vshrl.u32 %v60, 7
    %v62 = vsub.s32 0, %v61
    %v63 = vrot.slane %v58, %v62
    %v64 = vlaneseq
    %v65 = vshrl.u32 %v64, 7
    %v66 = vsub.s32 1, %v65
    %v67 = vrot.slane %v58, %v66
    %v74 = vunpack.c.l.b16 %v54
    %v75 = vunpack.c.h.b16 %v54
    %v76 = vunpack.c.l.b16 %v55
    %v77 = vunpack.c.h.b16 %v55
    %v78 = vunpack.c.l.b16 %v56
    %v79 = vunpack.c.h.b16 %v56
    %v80 = vunpack.c.l.b16 %v57
    %v81 = vunpack.c.h.b16 %v57
    %v82 = vpack.c.b16 %v76, %v74
    %v83 = vpack.c.b16 %v77, %v75
    %v84 = vpack.c.b16 %v80, %v78
    %v85 = vpack.c.b16 %v81, %v79
    %vm90 = vcmask 261120
    %v92 = vsel %vm90, %v53, 0
    %94 = vmatprep.subr.bf16.mxu0 %v83
    %95 = vmatpush1.bf16.msra.mxu0 %v82
    %96 = vmatprep.subr.bf16.mxu0 %v85
    %97 = vmatpush1.bf16.msra.mxu0 %v84
    %98 = vmatprep.subr.bf16.mxu0 0
    %99 = vmatpush1.bf16.msra.mxu0 0
    %100 = vmatprep.subr.bf16.mxu0 0
    %101 = vmatpush1.bf16.msra.mxu0 0
    %102 = vmatprep.subr.bf16.mxu0 0
    %103 = vmatpush1.bf16.msra.mxu0 0
    %104 = vmatprep.subr.bf16.mxu0 0
    %105 = vmatpush1.bf16.msra.mxu0 0
    %106 = vmatprep.subr.bf16.mxu0 0
    %107 = vmatpush1.bf16.msra.mxu0 0
    %108 = vmatprep.subr.bf16.mxu0 0
    %109 = vmatpush1.bf16.msra.mxu0 0
    %110 = vmatprep.subr.bf16.mxu0 0
    %111 = vmatpush1.bf16.msra.mxu0 0
    %112 = vmatprep.subr.bf16.mxu0 0
    %113 = vmatpush1.bf16.msra.mxu0 0
    %114 = vmatprep.subr.bf16.mxu0 0
    %115 = vmatpush1.bf16.msra.mxu0 0
    %116 = vmatprep.subr.bf16.mxu0 0
    %117 = vmatpush1.bf16.msra.mxu0 0
    %118 = vmatprep.subr.bf16.mxu0 0
    %119 = vmatpush1.bf16.msra.mxu0 0
    %120 = vmatprep.subr.bf16.mxu0 0
    %121 = vmatpush1.bf16.msra.mxu0 0
    %122 = vmatprep.subr.bf16.mxu0 0
    %123 = vmatpush1.bf16.msra.mxu0 0
    %124 = vmatprep.subr.bf16.mxu0 0
    %125 = vmatpush1.bf16.msra.mxu0 0
    %126 = vmatprep.mubr.bf16.mxu0 0
    %127 = vmatmul.mubr.bf16.gmra.mrb[0].mxu0 %v92
    %v128 = vpop.f32.mrb[0].mxu0
    %v129 = vadd.f32 %v63, %v128
    %v130 = vpop.f32.mrb[0].mxu0
    %v131 = vadd.f32 %v67, %v130
    %v132 = vpop.f32.mrb[0].mxu0
    %v133 = vadd.f32 %v63, %v132
    %v134 = vpop.f32.mrb[0].mxu0
    %v135 = vadd.f32 %v67, %v134
    %136 = vdwg.mxu0
    %v137 = vmax.f32 %v129, 0.0
    %v138 = vmax.f32 %v131, 0.0
    %v139 = vmax.f32 %v133, 0.0
    %v140 = vmax.f32 %v135, 0.0
    %v141 = vld [vmem:[%s3] sm:$0x3]
    %v143 = vlaneseq
    %v144 = vshrl.u32 %v143, 7
    %v145 = vsub.s32 0, %v144
    %v146 = vrot.slane %v141, %v145
    %v147 = vlaneseq
    %v148 = vshrl.u32 %v147, 7
    %v149 = vsub.s32 1, %v148
    %v150 = vrot.slane %v141, %v149
    %v153 = vmul.f32 %v137, %v146
    %v154 = vmul.f32 %v138, %v150
    %v155 = vmul.f32 %v139, %v146
    %v156 = vmul.f32 %v140, %v150
    %v157 = vadd.f32 %v153, %v154
    %158 = vadd.xlane.f32.xlu0 %v157
    %v159 = vpop.xlane.xlu0 %158
    %v160 = vadd.f32 %v155, %v156
    %161 = vadd.xlane.f32.xlu0 %v160
    %v162 = vpop.xlane.xlu0 %161
    %v163 = vld [vmem:[#allocation2] sm:$0x1]
    %v165 = vlaneseq
    %v166 = vshrl.u32 %v165, 7
    %v167 = vsub.s32 0, %v166
    %v168 = vrot.slane %v163, %v167
    %v170 = vadd.f32 %v159, %v168
    %v171 = vadd.f32 %v162, %v168
    %vm172 = vcmask 7168
    %173 = vst.msk [vmem:[%s5] sm:$0xff] %vm172, %v170
    %174 = vst.msk [vmem:[%s5 + $0x8] sm:$0xff] %vm172, %v171
    // Predicated region
    $region30: #{tpu_custom_call.1} parent=1 // pred_check
      _
    $region31: #{tpu_custom_call.1} parent=1 // pred_check_branch
      %176 = sbr.rel (0) target = $region33
    $region32: #{tpu_custom_call.1} parent=1 // pred_region
      _
    $region33: #{tpu_custom_call.1} parent=1 // pred_fallthru
      _
    // Predicated region
    $region34: #{tpu_custom_call.1} parent=1 // pred_check
      _
    $region35: #{tpu_custom_call.1} parent=1 // pred_check_branch
      %178 = sbr.rel (0) target = $region37
    $region36: #{tpu_custom_call.1} parent=1 // pred_region
      _
    $region37: #{tpu_custom_call.1} parent=1 // pred_fallthru
      _
    %179 = vsyncpa [#allocation4], 1
    %180 = vsyncpa [#allocation6], 1

</llo_original>
